<compile_context>
chip_gen: v7x
topology: tpu7x:2x2x1
jax: 0.10.0
libtpu: 0.0.40
codegen_flags: <defaults>
</compile_context>

<pallas_src>
import functools

import jax
import jax.numpy as jnp
from jax.experimental import pallas as pl
from jax.experimental.pallas import tpu as pltpu


# ----------------------------------------------------------------------------
# Shared polynomial + activation (pure VPU / EUP work, f32).
# ----------------------------------------------------------------------------
def _poly_act(x, w_ref, b_ref, K, num_hidden_layer, activation):
    """num_hidden_layer iterations of x <- act(b + sum_k w_k * x^(k+1))."""
    # Hoist SMEM-scalar -> vreg broadcasts out of the layer loop
    # (JAX does not CSE broadcast_in_dim).
    w_vec = [jnp.full_like(x, w_ref[k]) for k in range(K)]
    b_vec = jnp.full_like(x, b_ref[0])
    for _ in range(num_hidden_layer):
        # Horner evaluation of z = b + x*(w0 + x*(w1 + ... + x*w_{K-1})).
        p = w_vec[K - 1]
        for k in range(K - 2, -1, -1):
            p = w_vec[k] + x * p
        z = x * p + b_vec
        if activation == 1:
            x = jax.nn.sigmoid(z)
        elif activation == 2:
            x = jnp.maximum(z, 0.0)
        else:
            x = jnp.tanh(z)
    return x


# ----------------------------------------------------------------------------
# Fused small-N kernel: polynomial layers + (u * x) @ u^T per batch block.
# ----------------------------------------------------------------------------
def _fused_kernel(w_ref, b_ref, x_ref, u_ref, out_ref, xact_ref,
                  *, K, num_hidden_layer, activation):
    x = _poly_act(x_ref[...], w_ref, b_ref, K, num_hidden_layer, activation)
    xact_ref[...] = x                                 # (b_blk, 1, N) f32

    ub = u_ref[...]                                   # (b_blk, N, N) bf16 (from HBM)
    # u @ diag(x): scale columns of u by x.  Done on the bf16 copy directly —
    # no f32 (b_blk, N, N) temporary, no extra cast pass.
    ux = ub * x.astype(jnp.bfloat16)                  # (b_blk,1,N) broadcasts over rows
    # Batched matmul contracting the LAST axis of both operands:
    # (u @ diag(x)) @ u^T with no explicit transpose; f32 MXU accumulation.
    out = jax.lax.dot_general(
        ux, ub,
        dimension_numbers=(((2,), (2,)), ((0,), (0,))),
        preferred_element_type=jnp.float32)
    out_ref[...] = out.astype(out_ref.dtype)


# ----------------------------------------------------------------------------
# Large-N path, stage 1: polynomial layers only (emit x_act).
# ----------------------------------------------------------------------------
def _poly_kernel(w_ref, b_ref, x_ref, xact_ref,
                 *, K, num_hidden_layer, activation):
    xact_ref[...] = _poly_act(x_ref[...], w_ref, b_ref,
                              K, num_hidden_layer, activation)


# ----------------------------------------------------------------------------
# Large-N path, stage 2: tiled (u * x) @ u^T with an f32 VMEM accumulator.
# Grid = (B, N//tm, N//tn, N//tk); contraction axis last, marked "arbitrary".
# ----------------------------------------------------------------------------
def _tiled_matmul_kernel(xact_ref, ulhs_ref, urhs_ref, out_ref, acc_ref):
    k = pl.program_id(3)

    @pl.when(k == 0)
    def _():
        acc_ref[...] = jnp.zeros_like(acc_ref)

    xk = xact_ref[0]                                   # (1, tk)  bf16
    lhs = ulhs_ref[0]                                  # (tm, tk) bf16
    rhs = urhs_ref[0]                                  # (tn, tk) bf16
    acc_ref[...] += jax.lax.dot_general(
        lhs * xk, rhs,                                 # column-scale then contract last axes
        dimension_numbers=(((1,), (1,)), ((), ())),
        preferred_element_type=jnp.float32)

    @pl.when(k == pl.num_programs(3) - 1)
    def _():
        out_ref[0] = acc_ref[...].astype(out_ref.dtype)


# ----------------------------------------------------------------------------
# Helpers.
# ----------------------------------------------------------------------------
def _pick_batch_block(B, min_steps=8):
    """Largest divisor of B giving >= min(B, min_steps) grid steps.

    Keeping >= 2 steps makes dimension_semantics=("parallel",) actually shard
    the batch across v7x's two TensorCores, and a handful of steps lets
    BlockSpec double-buffering overlap u DMA / out writeback with compute.
    Per-step overhead is only ~0.35 us.
    """
    if B <= 1:
        return 1
    target = min(B, max(2, min_steps))
    for cand in range(max(1, B // target), 0, -1):
        if B % cand == 0:
            return cand
    return 1


def _compiler_params(dimension_semantics, est_vmem_bytes=None):
    kwargs = dict(dimension_semantics=dimension_semantics)
    if est_vmem_bytes is not None and est_vmem_bytes > (16 << 20):
        # Raise the scoped-VMEM limit past the conservative defaults
        # (16 MiB v5e / 32 MiB v6e & v7x) while staying well below v7x's
        # 64 MiB physical VMEM.
        kwargs["vmem_limit_bytes"] = int(min(est_vmem_bytes * 5 // 4, 56 << 20))
    return pltpu.CompilerParams(**kwargs)


def _forward_fused(x3, u_bf, w, b, *, K, num_hidden_layer, activation,
                   b_blk, out_dtype):
    B, _, N = x3.shape
    if b_blk is None:
        b_blk = _pick_batch_block(B)     # B=2 -> b_blk=1 -> grid (2,) -> both TCs
    assert B % b_blk == 0
    grid = (B // b_blk,)

    kernel = functools.partial(_fused_kernel, K=K,
                               num_hidden_layer=num_hidden_layer,
                               activation=activation)
    out_item = jnp.dtype(out_dtype).itemsize
    est = 2 * b_blk * N * N * (2 + out_item) + 8 * b_blk * N * 4 + (1 << 20)

    out, x_act = pl.pallas_call(
        kernel,
        grid=grid,
        in_specs=[
            pl.BlockSpec(memory_space=pltpu.MemorySpace.SMEM),            # w (K,)
            pl.BlockSpec(memory_space=pltpu.MemorySpace.SMEM),            # b (1,)
            pl.BlockSpec((b_blk, 1, N), lambda i: (i, 0, 0)),             # x (B,1,N)
            pl.BlockSpec((b_blk, N, N), lambda i: (i, 0, 0)),             # u (B,N,N) bf16
        ],
        out_specs=[
            pl.BlockSpec((b_blk, N, N), lambda i: (i, 0, 0)),             # output
            pl.BlockSpec((b_blk, 1, N), lambda i: (i, 0, 0)),             # x_act
        ],
        out_shape=[
            jax.ShapeDtypeStruct((B, N, N), out_dtype),
            jax.ShapeDtypeStruct((B, 1, N), jnp.float32),
        ],
        compiler_params=_compiler_params(("parallel",), est),
    )(w, b, x3, u_bf)
    return out, x_act


def _forward_tiled(x3, u_bf, w, b, *, K, num_hidden_layer, activation,
                   tm, tn, tk, out_dtype):
    B, _, N = x3.shape

    # Stage 1: polynomial + activation (tiny, VPU-only).
    bb = _pick_batch_block(B)
    poly = functools.partial(_poly_kernel, K=K,
                             num_hidden_layer=num_hidden_layer,
                             activation=activation)
    x_act = pl.pallas_call(
        poly,
        grid=(B // bb,),
        in_specs=[
            pl.BlockSpec(memory_space=pltpu.MemorySpace.SMEM),
            pl.BlockSpec(memory_space=pltpu.MemorySpace.SMEM),
            pl.BlockSpec((bb, 1, N), lambda i: (i, 0, 0)),
        ],
        out_specs=pl.BlockSpec((bb, 1, N), lambda i: (i, 0, 0)),
        out_shape=jax.ShapeDtypeStruct((B, 1, N), jnp.float32),
        compiler_params=_compiler_params(("parallel",)),
    )(w, b, x3)

    # Stage 2: tiled (u @ diag(x)) @ u^T.
    def _pick_tile(t):
        if t is not None:
            return t
        for cand in (512, 256, 128):      # >=512 lanes preferred (v6e), 128-aligned (v5e MXU)
            if N % cand == 0:
                return cand
        return N
    tm, tn, tk = _pick_tile(tm), _pick_tile(tn), _pick_tile(tk)
    assert N % tm == 0 and N % tn == 0 and N % tk == 0, (N, tm, tn, tk)

    x_bf = x_act.astype(jnp.bfloat16)
    out_item = jnp.dtype(out_dtype).itemsize
    # Double-buffered blocks + f32 accumulator + slack (VMEM budget; v7x scoped
    # default is 32 MiB of 64 MiB physical — _compiler_params raises the limit
    # only when this estimate needs it).
    est = (2 * (tk * 2 + tm * tk * 2 + tn * tk * 2 + tm * tn * out_item)
           + tm * tn * 4 + (2 << 20))

    grid = (B, N // tm, N // tn, N // tk)
    out = pl.pallas_call(
        _tiled_matmul_kernel,
        grid=grid,
        in_specs=[
            pl.BlockSpec((1, 1, tk), lambda bi, i, j, k: (bi, 0, k)),   # x_act (bf16)
            pl.BlockSpec((1, tm, tk), lambda bi, i, j, k: (bi, i, k)),  # u rows (lhs)
            pl.BlockSpec((1, tn, tk), lambda bi, i, j, k: (bi, j, k)),  # u rows (rhs, contracted)
        ],
        out_specs=pl.BlockSpec((1, tm, tn), lambda bi, i, j, k: (bi, i, j)),
        out_shape=jax.ShapeDtypeStruct((B, N, N), out_dtype),
        scratch_shapes=[pltpu.VMEM((tm, tn), jnp.float32)],
        compiler_params=_compiler_params(
            ("parallel", "parallel", "parallel", "arbitrary"), est),
    )(x_bf, u_bf, u_bf)
    return out, x_act


# ----------------------------------------------------------------------------
# Public wrapper.
# ----------------------------------------------------------------------------
def spectral_net_forward(x, u, conv_w, conv_b, *, K=5, num_hidden_layer=10,
                         activation=1, b_blk=None, tm=None, tn=None, tk=None,
                         out_dtype=jnp.float32, force_tiled=False):
    """x: (B,1,N,1) NCHW; u: (B,N,N); conv_w: (1,1,1,K); conv_b: (1,).

    Returns (output, x_diag) matching the PyTorch module:
      output: (B, N, N) = u @ diag(x_act) @ u^T   (MXU in bf16, f32 accumulation)
      x_diag: (B, 1, N, N) = eye(N) * x_act       (f32)

    out_dtype may be set to jnp.bfloat16 to additionally halve output
    writeback traffic if downstream tolerates it.
    """
    B, C, N, W = x.shape
    assert C == 1 and W == 1
    x3 = x.reshape(B, 1, N).astype(jnp.float32)
    # Carry u in bf16: halves HBM->VMEM traffic and VMEM blocks; the MXU
    # operands were bf16 anyway, so numerics are essentially unchanged.
    u_bf = u.astype(jnp.bfloat16)
    w = conv_w.reshape(K).astype(jnp.float32)
    b = conv_b.reshape(1).astype(jnp.float32)

    use_tiled = force_tiled or (N >= 512 and N % 128 == 0)
    if use_tiled:
        out, x_act = _forward_tiled(
            x3, u_bf, w, b, K=K, num_hidden_layer=num_hidden_layer,
            activation=activation, tm=tm, tn=tn, tk=tk, out_dtype=out_dtype)
    else:
        out, x_act = _forward_fused(
            x3, u_bf, w, b, K=K, num_hidden_layer=num_hidden_layer,
            activation=activation, b_blk=b_blk, out_dtype=out_dtype)

    # x_diag = eye(N) * broadcast(x_act): trivial XLA op kept out of the
    # serialized kernel loop (keeps N^2 zeros off the kernel store path).
    x_act2 = x_act.reshape(B, N).astype(jnp.float32)
    eye = jnp.eye(N, dtype=jnp.float32)
    x_diag = eye[None, None, :, :] * x_act2[:, None, :, None]
    return out, x_diag


# ----------------------------------------------------------------------------
# Pure-JAX f32 reference mirroring the PyTorch forward.
# ----------------------------------------------------------------------------
def _reference(x, u, conv_w, conv_b, *, K, num_hidden_layer, activation):
    B, _, N, _ = x.shape
    xv = x.reshape(B, N).astype(jnp.float32)
    w = conv_w.reshape(K).astype(jnp.float32)
    b = conv_b.reshape(()).astype(jnp.float32)
    for _ in range(num_hidden_layer):
        z = jnp.full_like(xv, b)
        for k in range(K):
            z = z + w[k] * xv ** (k + 1)
        if activation == 1:
            xv = jax.nn.sigmoid(z)
        elif activation == 2:
            xv = jnp.maximum(z, 0.0)
        else:
            xv = jnp.tanh(z)
    eye = jnp.eye(N, dtype=jnp.float32)
    xd = eye[None, None] * xv[:, None, :, None]
    out = jnp.matmul(
        jnp.matmul(u, xd[:, 0], precision=jax.lax.Precision.HIGHEST),
        jnp.swapaxes(u, 1, 2), precision=jax.lax.Precision.HIGHEST)
    return out, xd


if __name__ == "__main__":
    K = 5
    num_hidden_layer = 10
    activation = 1          # sigmoid branch (PyTorch default)
    B, N = 2, 16

    key = jax.random.PRNGKey(0)
    kx, ku, kw, kb = jax.random.split(key, 4)
    x = jax.random.normal(kx, (B, 1, N, 1), dtype=jnp.float32)   # NCHW, W=1
    u = jax.random.normal(ku, (B, N, N), dtype=jnp.float32)
    conv_w = 0.2 * jax.random.normal(kw, (1, 1, 1, K), dtype=jnp.float32)
    conv_b = 0.1 * jax.random.normal(kb, (1,), dtype=jnp.float32)

    # --- fused small-N path (the shipped shape; grid=(2,) -> 2 TC on v7x) ---
    out, xd = spectral_net_forward(
        x, u, conv_w, conv_b,
        K=K, num_hidden_layer=num_hidden_layer, activation=activation)
    jax.block_until_ready((out, xd))

    ref_out, ref_xd = _reference(
        x, u, conv_w, conv_b,
        K=K, num_hidden_layer=num_hidden_layer, activation=activation)
    assert out.shape == (B, N, N) and xd.shape == (B, 1, N, N)
    # x_diag comes from the pure-f32 VPU path: tight check.
    assert jnp.allclose(xd, ref_xd, rtol=1e-4, atol=1e-5), "x_diag mismatch"
    # output uses bf16 MXU operands with f32 accumulation -> bf16-level tol.
    assert jnp.allclose(out, ref_out, rtol=1e-2, atol=5e-2), "output mismatch"

    # --- forced-tiled path check (exercises the large-N tiling plan) --------
    N2 = 256
    kx2, ku2 = jax.random.split(jax.random.PRNGKey(1), 2)
    x_big = jax.random.normal(kx2, (B, 1, N2, 1), dtype=jnp.float32)
    u_big = jax.random.normal(ku2, (B, N2, N2), dtype=jnp.float32)
    out2, xd2 = spectral_net_forward(
        x_big, u_big, conv_w, conv_b,
        K=K, num_hidden_layer=num_hidden_layer, activation=activation,
        force_tiled=True, tm=128, tn=128, tk=128)   # grid (2,2,2,2)
    jax.block_until_ready((out2, xd2))

    ref_out2, ref_xd2 = _reference(
        x_big, u_big, conv_w, conv_b,
        K=K, num_hidden_layer=num_hidden_layer, activation=activation)
    assert out2.shape == (B, N2, N2) and xd2.shape == (B, 1, N2, N2)
    assert jnp.allclose(xd2, ref_xd2, rtol=1e-4, atol=1e-5), "tiled x_diag mismatch"
    # bf16 operand error grows with the contraction length (N=256) -> looser tol.
    assert jnp.allclose(out2, ref_out2, rtol=3e-2, atol=3e-1), "tiled output mismatch"

    print("KERNEL_OK")
</pallas_src>

<mosaic_0001>
module attributes {stable_mosaic.version = 11 : i64} {
  func.func @_fused_kernel(%arg0: i32, %arg1: memref<5xf32, #tpu.memory_space<smem>>, %arg2: memref<1xf32, #tpu.memory_space<smem>>, %arg3: memref<1x1x16xf32, #tpu.memory_space<vmem>>, %arg4: memref<1x16x16xbf16, #tpu.memory_space<vmem>>, %arg5: memref<1x16x16xf32, #tpu.memory_space<vmem>>, %arg6: memref<1x1x16xf32, #tpu.memory_space<vmem>>) attributes {dimension_semantics = [#tpu.dimension_semantics<parallel>], iteration_bounds = array<i64: 2>, scalar_prefetch = 0 : i64, scratch_operands = 0 : i64, tpu.core_type = #tpu.core_type<tc>, window_params = [{transform_indices = @transform_0, window_bounds = array<i64: 5>}, {transform_indices = @transform_1, window_bounds = array<i64: 1>}, {transform_indices = @transform_2, window_bounds = array<i64: 1, 1, 16>}, {transform_indices = @transform_3, window_bounds = array<i64: 1, 16, 16>}, {transform_indices = @transform_4, window_bounds = array<i64: 1, 16, 16>}, {transform_indices = @transform_5, window_bounds = array<i64: 1, 1, 16>}]} {
    %c0 = arith.constant 0 : index
    %c0_0 = arith.constant 0 : index
    %c0_1 = arith.constant 0 : index
    %0 = vector.load %arg3[%c0, %c0_0, %c0_1] : memref<1x1x16xf32, #tpu.memory_space<vmem>>, vector<1x1x16xf32>
    %c0_2 = arith.constant 0 : index
    %1 = memref.load %arg1[%c0_2] : memref<5xf32, #tpu.memory_space<smem>>
    %2 = vector.broadcast %1 : f32 to vector<1x1x16xf32>
    %c1 = arith.constant 1 : index
    %3 = memref.load %arg1[%c1] : memref<5xf32, #tpu.memory_space<smem>>
    %4 = vector.broadcast %3 : f32 to vector<1x1x16xf32>
    %c2 = arith.constant 2 : index
    %5 = memref.load %arg1[%c2] : memref<5xf32, #tpu.memory_space<smem>>
    %6 = vector.broadcast %5 : f32 to vector<1x1x16xf32>
    %c3 = arith.constant 3 : index
    %7 = memref.load %arg1[%c3] : memref<5xf32, #tpu.memory_space<smem>>
    %8 = vector.broadcast %7 : f32 to vector<1x1x16xf32>
    %c4 = arith.constant 4 : index
    %9 = memref.load %arg1[%c4] : memref<5xf32, #tpu.memory_space<smem>>
    %10 = vector.broadcast %9 : f32 to vector<1x1x16xf32>
    %c0_3 = arith.constant 0 : index
    %11 = memref.load %arg2[%c0_3] : memref<1xf32, #tpu.memory_space<smem>>
    %12 = vector.broadcast %11 : f32 to vector<1x1x16xf32>
    %13 = arith.mulf %0, %10 : vector<1x1x16xf32>
    %14 = arith.addf %8, %13 : vector<1x1x16xf32>
    %15 = arith.mulf %0, %14 : vector<1x1x16xf32>
    %16 = arith.addf %6, %15 : vector<1x1x16xf32>
    %17 = arith.mulf %0, %16 : vector<1x1x16xf32>
    %18 = arith.addf %4, %17 : vector<1x1x16xf32>
    %19 = arith.mulf %0, %18 : vector<1x1x16xf32>
    %20 = arith.addf %2, %19 : vector<1x1x16xf32>
    %21 = arith.mulf %0, %20 : vector<1x1x16xf32>
    %22 = arith.addf %21, %12 : vector<1x1x16xf32>
    %23 = arith.negf %22 : vector<1x1x16xf32>
    %24 = math.exp %23 : vector<1x1x16xf32>
    %cst = arith.constant 1.000000e+00 : f32
    %25 = vector.broadcast %cst : f32 to vector<1x1x16xf32>
    %26 = arith.addf %25, %24 : vector<1x1x16xf32>
    %27 = arith.divf %25, %26 : vector<1x1x16xf32>
    %28 = arith.mulf %27, %10 : vector<1x1x16xf32>
    %29 = arith.addf %8, %28 : vector<1x1x16xf32>
    %30 = arith.mulf %27, %29 : vector<1x1x16xf32>
    %31 = arith.addf %6, %30 : vector<1x1x16xf32>
    %32 = arith.mulf %27, %31 : vector<1x1x16xf32>
    %33 = arith.addf %4, %32 : vector<1x1x16xf32>
    %34 = arith.mulf %27, %33 : vector<1x1x16xf32>
    %35 = arith.addf %2, %34 : vector<1x1x16xf32>
    %36 = arith.mulf %27, %35 : vector<1x1x16xf32>
    %37 = arith.addf %36, %12 : vector<1x1x16xf32>
    %38 = arith.negf %37 : vector<1x1x16xf32>
    %39 = math.exp %38 : vector<1x1x16xf32>
    %cst_4 = arith.constant 1.000000e+00 : f32
    %40 = vector.broadcast %cst_4 : f32 to vector<1x1x16xf32>
    %41 = arith.addf %40, %39 : vector<1x1x16xf32>
    %42 = arith.divf %40, %41 : vector<1x1x16xf32>
    %43 = arith.mulf %42, %10 : vector<1x1x16xf32>
    %44 = arith.addf %8, %43 : vector<1x1x16xf32>
    %45 = arith.mulf %42, %44 : vector<1x1x16xf32>
    %46 = arith.addf %6, %45 : vector<1x1x16xf32>
    %47 = arith.mulf %42, %46 : vector<1x1x16xf32>
    %48 = arith.addf %4, %47 : vector<1x1x16xf32>
    %49 = arith.mulf %42, %48 : vector<1x1x16xf32>
    %50 = arith.addf %2, %49 : vector<1x1x16xf32>
    %51 = arith.mulf %42, %50 : vector<1x1x16xf32>
    %52 = arith.addf %51, %12 : vector<1x1x16xf32>
    %53 = arith.negf %52 : vector<1x1x16xf32>
    %54 = math.exp %53 : vector<1x1x16xf32>
    %cst_5 = arith.constant 1.000000e+00 : f32
    %55 = vector.broadcast %cst_5 : f32 to vector<1x1x16xf32>
    %56 = arith.addf %55, %54 : vector<1x1x16xf32>
    %57 = arith.divf %55, %56 : vector<1x1x16xf32>
    %58 = arith.mulf %57, %10 : vector<1x1x16xf32>
    %59 = arith.addf %8, %58 : vector<1x1x16xf32>
    %60 = arith.mulf %57, %59 : vector<1x1x16xf32>
    %61 = arith.addf %6, %60 : vector<1x1x16xf32>
    %62 = arith.mulf %57, %61 : vector<1x1x16xf32>
    %63 = arith.addf %4, %62 : vector<1x1x16xf32>
    %64 = arith.mulf %57, %63 : vector<1x1x16xf32>
    %65 = arith.addf %2, %64 : vector<1x1x16xf32>
    %66 = arith.mulf %57, %65 : vector<1x1x16xf32>
    %67 = arith.addf %66, %12 : vector<1x1x16xf32>
    %68 = arith.negf %67 : vector<1x1x16xf32>
    %69 = math.exp %68 : vector<1x1x16xf32>
    %cst_6 = arith.constant 1.000000e+00 : f32
    %70 = vector.broadcast %cst_6 : f32 to vector<1x1x16xf32>
    %71 = arith.addf %70, %69 : vector<1x1x16xf32>
    %72 = arith.divf %70, %71 : vector<1x1x16xf32>
    %73 = arith.mulf %72, %10 : vector<1x1x16xf32>
    %74 = arith.addf %8, %73 : vector<1x1x16xf32>
    %75 = arith.mulf %72, %74 : vector<1x1x16xf32>
    %76 = arith.addf %6, %75 : vector<1x1x16xf32>
    %77 = arith.mulf %72, %76 : vector<1x1x16xf32>
    %78 = arith.addf %4, %77 : vector<1x1x16xf32>
    %79 = arith.mulf %72, %78 : vector<1x1x16xf32>
    %80 = arith.addf %2, %79 : vector<1x1x16xf32>
    %81 = arith.mulf %72, %80 : vector<1x1x16xf32>
    %82 = arith.addf %81, %12 : vector<1x1x16xf32>
    %83 = arith.negf %82 : vector<1x1x16xf32>
    %84 = math.exp %83 : vector<1x1x16xf32>
    %cst_7 = arith.constant 1.000000e+00 : f32
    %85 = vector.broadcast %cst_7 : f32 to vector<1x1x16xf32>
    %86 = arith.addf %85, %84 : vector<1x1x16xf32>
    %87 = arith.divf %85, %86 : vector<1x1x16xf32>
    %88 = arith.mulf %87, %10 : vector<1x1x16xf32>
    %89 = arith.addf %8, %88 : vector<1x1x16xf32>
    %90 = arith.mulf %87, %89 : vector<1x1x16xf32>
    %91 = arith.addf %6, %90 : vector<1x1x16xf32>
    %92 = arith.mulf %87, %91 : vector<1x1x16xf32>
    %93 = arith.addf %4, %92 : vector<1x1x16xf32>
    %94 = arith.mulf %87, %93 : vector<1x1x16xf32>
    %95 = arith.addf %2, %94 : vector<1x1x16xf32>
    %96 = arith.mulf %87, %95 : vector<1x1x16xf32>
    %97 = arith.addf %96, %12 : vector<1x1x16xf32>
    %98 = arith.negf %97 : vector<1x1x16xf32>
    %99 = math.exp %98 : vector<1x1x16xf32>
    %cst_8 = arith.constant 1.000000e+00 : f32
    %100 = vector.broadcast %cst_8 : f32 to vector<1x1x16xf32>
    %101 = arith.addf %100, %99 : vector<1x1x16xf32>
    %102 = arith.divf %100, %101 : vector<1x1x16xf32>
    %103 = arith.mulf %102, %10 : vector<1x1x16xf32>
    %104 = arith.addf %8, %103 : vector<1x1x16xf32>
    %105 = arith.mulf %102, %104 : vector<1x1x16xf32>
    %106 = arith.addf %6, %105 : vector<1x1x16xf32>
    %107 = arith.mulf %102, %106 : vector<1x1x16xf32>
    %108 = arith.addf %4, %107 : vector<1x1x16xf32>
    %109 = arith.mulf %102, %108 : vector<1x1x16xf32>
    %110 = arith.addf %2, %109 : vector<1x1x16xf32>
    %111 = arith.mulf %102, %110 : vector<1x1x16xf32>
    %112 = arith.addf %111, %12 : vector<1x1x16xf32>
    %113 = arith.negf %112 : vector<1x1x16xf32>
    %114 = math.exp %113 : vector<1x1x16xf32>
    %cst_9 = arith.constant 1.000000e+00 : f32
    %115 = vector.broadcast %cst_9 : f32 to vector<1x1x16xf32>
    %116 = arith.addf %115, %114 : vector<1x1x16xf32>
    %117 = arith.divf %115, %116 : vector<1x1x16xf32>
    %118 = arith.mulf %117, %10 : vector<1x1x16xf32>
    %119 = arith.addf %8, %118 : vector<1x1x16xf32>
    %120 = arith.mulf %117, %119 : vector<1x1x16xf32>
    %121 = arith.addf %6, %120 : vector<1x1x16xf32>
    %122 = arith.mulf %117, %121 : vector<1x1x16xf32>
    %123 = arith.addf %4, %122 : vector<1x1x16xf32>
    %124 = arith.mulf %117, %123 : vector<1x1x16xf32>
    %125 = arith.addf %2, %124 : vector<1x1x16xf32>
    %126 = arith.mulf %117, %125 : vector<1x1x16xf32>
    %127 = arith.addf %126, %12 : vector<1x1x16xf32>
    %128 = arith.negf %127 : vector<1x1x16xf32>
    %129 = math.exp %128 : vector<1x1x16xf32>
    %cst_10 = arith.constant 1.000000e+00 : f32
    %130 = vector.broadcast %cst_10 : f32 to vector<1x1x16xf32>
    %131 = arith.addf %130, %129 : vector<1x1x16xf32>
    %132 = arith.divf %130, %131 : vector<1x1x16xf32>
    %133 = arith.mulf %132, %10 : vector<1x1x16xf32>
    %134 = arith.addf %8, %133 : vector<1x1x16xf32>
    %135 = arith.mulf %132, %134 : vector<1x1x16xf32>
    %136 = arith.addf %6, %135 : vector<1x1x16xf32>
    %137 = arith.mulf %132, %136 : vector<1x1x16xf32>
    %138 = arith.addf %4, %137 : vector<1x1x16xf32>
    %139 = arith.mulf %132, %138 : vector<1x1x16xf32>
    %140 = arith.addf %2, %139 : vector<1x1x16xf32>
    %141 = arith.mulf %132, %140 : vector<1x1x16xf32>
    %142 = arith.addf %141, %12 : vector<1x1x16xf32>
    %143 = arith.negf %142 : vector<1x1x16xf32>
    %144 = math.exp %143 : vector<1x1x16xf32>
    %cst_11 = arith.constant 1.000000e+00 : f32
    %145 = vector.broadcast %cst_11 : f32 to vector<1x1x16xf32>
    %146 = arith.addf %145, %144 : vector<1x1x16xf32>
    %147 = arith.divf %145, %146 : vector<1x1x16xf32>
    %148 = arith.mulf %147, %10 : vector<1x1x16xf32>
    %149 = arith.addf %8, %148 : vector<1x1x16xf32>
    %150 = arith.mulf %147, %149 : vector<1x1x16xf32>
    %151 = arith.addf %6, %150 : vector<1x1x16xf32>
    %152 = arith.mulf %147, %151 : vector<1x1x16xf32>
    %153 = arith.addf %4, %152 : vector<1x1x16xf32>
    %154 = arith.mulf %147, %153 : vector<1x1x16xf32>
    %155 = arith.addf %2, %154 : vector<1x1x16xf32>
    %156 = arith.mulf %147, %155 : vector<1x1x16xf32>
    %157 = arith.addf %156, %12 : vector<1x1x16xf32>
    %158 = arith.negf %157 : vector<1x1x16xf32>
    %159 = math.exp %158 : vector<1x1x16xf32>
    %cst_12 = arith.constant 1.000000e+00 : f32
    %160 = vector.broadcast %cst_12 : f32 to vector<1x1x16xf32>
    %161 = arith.addf %160, %159 : vector<1x1x16xf32>
    %162 = arith.divf %160, %161 : vector<1x1x16xf32>
    %c0_13 = arith.constant 0 : index
    %c0_14 = arith.constant 0 : index
    %c0_15 = arith.constant 0 : index
    %163 = vector.load %arg6[%c0_13, %c0_14, %c0_15] : memref<1x1x16xf32, #tpu.memory_space<vmem>>, vector<1x1x16xf32>
    tpu.vector_store %arg6[%c0_13, %c0_14, %c0_15], %162 {strides = array<i32>} : memref<1x1x16xf32, #tpu.memory_space<vmem>>, vector<1x1x16xf32>,
    %c0_16 = arith.constant 0 : index
    %c0_17 = arith.constant 0 : index
    %c0_18 = arith.constant 0 : index
    %164 = vector.load %arg4[%c0_16, %c0_17, %c0_18] : memref<1x16x16xbf16, #tpu.memory_space<vmem>>, vector<1x16x16xbf16>
    %165 = arith.truncf %162 : vector<1x1x16xf32> to vector<1x1x16xbf16>
    %166 = vector.broadcast %165 : vector<1x1x16xbf16> to vector<1x16x16xbf16>
    %167 = arith.mulf %164, %166 : vector<1x16x16xbf16>
    %cst_19 = arith.constant dense<0.000000e+00> : vector<1x16x16xf32>
    %168 = tpu.matmul %167, %164, %cst_19 {dimension_numbers = #tpu.dot_dimension_numbers<[2], [2], [1], [1], [0, 0, 0, 1, 1, 1], [0], [0]>} : vector<1x16x16xbf16>, vector<1x16x16xbf16>, vector<1x16x16xf32> -> vector<1x16x16xf32>
    %c0_20 = arith.constant 0 : index
    %c0_21 = arith.constant 0 : index
    %c0_22 = arith.constant 0 : index
    %169 = vector.load %arg5[%c0_20, %c0_21, %c0_22] : memref<1x16x16xf32, #tpu.memory_space<vmem>>, vector<1x16x16xf32>
    tpu.vector_store %arg5[%c0_20, %c0_21, %c0_22], %168 {strides = array<i32>} : memref<1x16x16xf32, #tpu.memory_space<vmem>>, vector<1x16x16xf32>,
    return
  }
  func.func @transform_0(%arg0: i32) -> i32 {
    %c0_i32 = arith.constant 0 : i32
    %c0_i32_0 = arith.constant 0 : i32
    return %c0_i32 : i32
  }
  func.func @transform_1(%arg0: i32) -> i32 {
    %c0_i32 = arith.constant 0 : i32
    %c0_i32_0 = arith.constant 0 : i32
    return %c0_i32 : i32
  }
  func.func @transform_2(%arg0: i32) -> (i32, i32, i32) {
    %c0_i32 = arith.constant 0 : i32
    %c0_i32_0 = arith.constant 0 : i32
    %c0_i32_1 = arith.constant 0 : i32
    return %arg0, %c0_i32, %c0_i32_0 : i32, i32, i32
  }
  func.func @transform_3(%arg0: i32) -> (i32, i32, i32) {
    %c0_i32 = arith.constant 0 : i32
    %c0_i32_0 = arith.constant 0 : i32
    %c0_i32_1 = arith.constant 0 : i32
    return %arg0, %c0_i32, %c0_i32_0 : i32, i32, i32
  }
  func.func @transform_4(%arg0: i32) -> (i32, i32, i32) {
    %c0_i32 = arith.constant 0 : i32
    %c0_i32_0 = arith.constant 0 : i32
    %c0_i32_1 = arith.constant 0 : i32
    return %arg0, %c0_i32, %c0_i32_0 : i32, i32, i32
  }
  func.func @transform_5(%arg0: i32) -> (i32, i32, i32) {
    %c0_i32 = arith.constant 0 : i32
    %c0_i32_0 = arith.constant 0 : i32
    %c0_i32_1 = arith.constant 0 : i32
    return %arg0, %c0_i32, %c0_i32_0 : i32, i32, i32
  }
}

</mosaic_0001>

<llo_original>
// kernel: tpu_custom_call.1
$region0: #{tpu_custom_call.1}
  #allocation0 [shape = 'u32[]', space=smem, size = 0x4, offset = 0x4, fixed_abs, tag = 'smem constant byte address 0x4 - core index']
  #allocation1 [shape = 'u32[144,128]{1,0:T(1,128)}', space=vmem, size = 0x12000, scoped, tag = 'internal scratch']
  #allocation2 [shape = 'f32[1]{0:T(128)S(6)}', space=smem, size = 0x200, scoped, tag = 'scoped memory for tpu_custom_call.1']
  %s0 = inlined_call_operand.vmem [shape: f32[5], index: 0, kind: input, shape index: {}]
  %s1 = inlined_call_operand.<no memory space> [shape: f32[1], index: 1, kind: input, shape index: {}]
  %s2 = inlined_call_operand.vmem [shape: f32[2,1,16], index: 2, kind: input, shape index: {}]
  %s3 = inlined_call_operand.hbm [shape: bf16[2,16,16], index: 3, kind: input, shape index: {}]
  %s4 = inlined_call_operand.hbm [shape: f32[2,16,16], index: 4, kind: output, shape index: {0}]
  %s5 = inlined_call_operand.hbm [shape: f32[2,1,16], index: 5, kind: output, shape index: {1}]
  %6 = xla_tuple %s4, %s5
  %s7 = sld [smem:[#allocation0]]
  $region65: #{tpu_custom_call.1} parent=0
    _
  %s9 = ssub.s32 1, %s7
  %s10 = scalar_select 0, %s9, %s7
  %11 = sst [smem:[#allocation2]] %s1
  $region1: #{tpu_custom_call.1} parent=0
    #allocation3 [shape = 'u8[512]{0}', space=smem, size = 0x200, scoped, tag = 'input window, operand 0, single buffered']
    #allocation4 [shape = 's32[2]{0}', space=sflag, size = 0x8, scoped, tag = 'scoped memory for tpu_custom_call.1']
    #allocation5 [shape = 's32[2]{0}', space=sflag, size = 0x8, scoped, tag = 'scoped memory for tpu_custom_call.1']
    #allocation6 [shape = 's32[2]{0}', space=sflag, size = 0x8, scoped, tag = 'scoped memory for tpu_custom_call.1']
    #allocation7 [shape = 'u8[8192]{0}', space=vmem, size = 0x2000, scoped, tag = 'input window, operand 3']
    #allocation8 [shape = 'u8[16384]{0}', space=vmem, size = 0x4000, scoped, tag = 'output window, operand 0']
    #allocation9 [shape = 'u8[1024]{0}', space=vmem, size = 0x400, scoped, tag = 'output window, operand 1']
    #allocation10 [shape = 's32[2]{0}', space=sflag, size = 0x8, scoped, tag = 'scoped memory for tpu_custom_call.1']
    %12 = vsyncpa [#allocation6], 0
    %13 = vsyncpa [#allocation4], 0
    %s14 = scalar_lea.sflag [#allocation4], 1
    %15 = vsyncpa %s14, 0
    %16 = vsyncpa [#allocation5], 0
    %s17 = scalar_lea.sflag [#allocation5], 1
    %18 = vsyncpa %s17, 0
    %19 = vsyncpa [#allocation10], 0
    %s20 = scalar_lea.sflag [#allocation10], 1
    %21 = vsyncpa %s20, 0
    loop: start=0, step=1, limit=4
    $region2: #{tpu_custom_call.1} parent=1 // loop_pre_header
      _
    $region3: #{tpu_custom_call.1} parent=1 // loop_header
      %s23 = sphi 0, %s27
      %p24 = scmp.ge.s32.totalorder %s23, 4
      %s31 = sphi 0, %s31
      %s33 = sphi 0, %s31
      %s34 = sphi 0, %s33
      %s48 = sphi 0, %s34
      %s52 = sphi 0, %s52
      %s54 = sphi 0, %s52
      %s55 = sphi 0, %s54
      %s69 = sphi 0, %s55
      %s75 = sphi 0, %s77
      %s78 = sphi 0, %s75
      %s79 = sphi 0, %s78
      %s95 = sphi 0, %s79
      %s101 = sphi 0, %s103
      %s104 = sphi 0, %s101
      %s105 = sphi 0, %s104
      %s121 = sphi 0, %s105
      %s127 = sphi 0, %s129
      %s130 = sphi 0, %s127
      %s131 = sphi 0, %s130
      %s147 = sphi 0, %s131
      %s153 = sphi 0, %s155
      %s156 = sphi 0, %s153
      %s157 = sphi 0, %s156
      %s173 = sphi 0, %s157
    $region4: #{tpu_custom_call.1} parent=1 // loop_header_branch
      %26 = sbr.rel (%p24) target = $region8
    $region5: #{tpu_custom_call.1} parent=1 // loop_body
      %s28 = ssub.s32 %s23, 1
      %s29 = ssub.s32 %s23, 2
      %s30 = sadd.s32 %s23, 1
      %s32 = sadd.s32 %s31, 1
      %p35 = scmp.eq.s32.totalorder %s23, 1
      %p36 = scmp.ne.s32.totalorder %s31, %s33
      %p37 = scmp.eq.s32.totalorder %s23, 0
      %p38 = por %p36, %p37
      %p39 = scmp.ne.s32.totalorder %s31, %s33
      %p40 = scmp.eq.s32.totalorder %s28, 1
      %p41 = por %p39, %p40
      %p42 = scmp.ne.s32.totalorder %s33, %s34
      %p43 = scmp.eq.s32.totalorder %s28, 0
      %p44 = por %p42, %p43
      %p45 = scmp.ne.s32.totalorder %s33, %s34
      %p46 = scmp.eq.s32.totalorder %s29, 1
      %p47 = por %p45, %p46
      %p49 = scmp.ne.s32.totalorder %s34, %s48
      %p50 = scmp.eq.s32.totalorder %s29, 0
      %p51 = por %p49, %p50
      %s53 = sadd.s32 %s52, 1
      %p56 = scmp.eq.s32.totalorder %s23, 1
      %p57 = scmp.ne.s32.totalorder %s52, %s54
      %p58 = scmp.eq.s32.totalorder %s23, 0
      %p59 = por %p57, %p58
      %p60 = scmp.ne.s32.totalorder %s52, %s54
      %p61 = scmp.eq.s32.totalorder %s28, 1
      %p62 = por %p60, %p61
      %p63 = scmp.ne.s32.totalorder %s54, %s55
      %p64 = scmp.eq.s32.totalorder %s28, 0
      %p65 = por %p63, %p64
      %p66 = scmp.ne.s32.totalorder %s54, %s55
      %p67 = scmp.eq.s32.totalorder %s29, 1
      %p68 = por %p66, %p67
      %p70 = scmp.ne.s32.totalorder %s55, %s69
      %p71 = scmp.eq.s32.totalorder %s29, 0
      %p72 = por %p70, %p71
      %s73 = ssub.s32 %s23, %s30
      %p74 = scmp.eq.s32.totalorder %s73, 0
      %s76 = sadd.s32 %s75, 1
      %s77 = scalar_select %p74, %s75, %s76
      %p80 = pneg %p74
      %p81 = scmp.eq.s32.totalorder %s23, 1
      %p82 = por %p80, %p81
      %p83 = scmp.ne.s32.totalorder %s75, %s78
      %p84 = scmp.eq.s32.totalorder %s23, 0
      %p85 = por %p83, %p84
      %p86 = scmp.ne.s32.totalorder %s75, %s78
      %p87 = scmp.eq.s32.totalorder %s28, 1
      %p88 = por %p86, %p87
      %p89 = scmp.ne.s32.totalorder %s78, %s79
      %p90 = scmp.eq.s32.totalorder %s28, 0
      %p91 = por %p89, %p90
      %p92 = scmp.ne.s32.totalorder %s78, %s79
      %p93 = scmp.eq.s32.totalorder %s29, 1
      %p94 = por %p92, %p93
      %p96 = scmp.ne.s32.totalorder %s79, %s95
      %p97 = scmp.eq.s32.totalorder %s29, 0
      %p98 = por %p96, %p97
      %s99 = ssub.s32 %s23, %s30
      %p100 = scmp.eq.s32.totalorder %s99, 0
      %s102 = sadd.s32 %s101, 1
      %s103 = scalar_select %p100, %s101, %s102
      %p106 = pneg %p100
      %p107 = scmp.eq.s32.totalorder %s23, 1
      %p108 = por %p106, %p107
      %p109 = scmp.ne.s32.totalorder %s101, %s104
      %p110 = scmp.eq.s32.totalorder %s23, 0
      %p111 = por %p109, %p110
      %p112 = scmp.ne.s32.totalorder %s101, %s104
      %p113 = scmp.eq.s32.totalorder %s28, 1
      %p114 = por %p112, %p113
      %p115 = scmp.ne.s32.totalorder %s104, %s105
      %p116 = scmp.eq.s32.totalorder %s28, 0
      %p117 = por %p115, %p116
      %p118 = scmp.ne.s32.totalorder %s104, %s105
      %p119 = scmp.eq.s32.totalorder %s29, 1
      %p120 = por %p118, %p119
      %p122 = scmp.ne.s32.totalorder %s105, %s121
      %p123 = scmp.eq.s32.totalorder %s29, 0
      %p124 = por %p122, %p123
      %s125 = ssub.s32 %s23, %s30
      %p126 = scmp.eq.s32.totalorder %s125, 0
      %s128 = sadd.s32 %s127, 1
      %s129 = scalar_select %p126, %s127, %s128
      %p132 = pneg %p126
      %p133 = scmp.eq.s32.totalorder %s23, 1
      %p134 = por %p132, %p133
      %p135 = scmp.ne.s32.totalorder %s127, %s130
      %p136 = scmp.eq.s32.totalorder %s23, 0
      %p137 = por %p135, %p136
      %p138 = scmp.ne.s32.totalorder %s127, %s130
      %p139 = scmp.eq.s32.totalorder %s28, 1
      %p140 = por %p138, %p139
      %p141 = scmp.ne.s32.totalorder %s130, %s131
      %p142 = scmp.eq.s32.totalorder %s28, 0
      %p143 = por %p141, %p142
      %p144 = scmp.ne.s32.totalorder %s130, %s131
      %p145 = scmp.eq.s32.totalorder %s29, 1
      %p146 = por %p144, %p145
      %p148 = scmp.ne.s32.totalorder %s131, %s147
      %p149 = scmp.eq.s32.totalorder %s29, 0
      %p150 = por %p148, %p149
      %s151 = ssub.s32 %s23, %s30
      %p152 = scmp.eq.s32.totalorder %s151, 0
      %s154 = sadd.s32 %s153, 1
      %s155 = scalar_select %p152, %s153, %s154
      %p158 = pneg %p152
      %p159 = scmp.eq.s32.totalorder %s23, 1
      %p160 = por %p158, %p159
      %p161 = scmp.ne.s32.totalorder %s153, %s156
      %p162 = scmp.eq.s32.totalorder %s23, 0
      %p163 = por %p161, %p162
      %p164 = scmp.ne.s32.totalorder %s153, %s156
      %p165 = scmp.eq.s32.totalorder %s28, 1
      %p166 = por %p164, %p165
      %p167 = scmp.ne.s32.totalorder %s156, %s157
      %p168 = scmp.eq.s32.totalorder %s28, 0
      %p169 = por %p167, %p168
      %p170 = scmp.ne.s32.totalorder %s156, %s157
      %p171 = scmp.eq.s32.totalorder %s29, 1
      %p172 = por %p170, %p171
      %p174 = scmp.ne.s32.totalorder %s157, %s173
      %p175 = scmp.eq.s32.totalorder %s29, 0
      %p176 = por %p174, %p175
      %p177 = scmp.le.s32.totalorder 1, %s23
      %p178 = scmp.lt.s32.totalorder %s23, 3
      %p179 = pnand %p177, %p178
      %p180 = pneg %p179
      // Predicated region
      $region9: #{tpu_custom_call.1} parent=5 // pred_check
        _
      $region10: #{tpu_custom_call.1} parent=5 // pred_check_branch
        %182 = sbr.rel (%p179) target = $region12
      $region11: #{tpu_custom_call.1} parent=5 // pred_region
        %s183 = ssub.s32 %s23, 1
        // Predicated region
        $region13: #{tpu_custom_call.1} parent=11 // pred_check
          %p184 = pneg %p44
        $region14: #{tpu_custom_call.1} parent=11 // pred_check_branch
          %186 = sbr.rel (%p184) target = $region16
        $region15: #{tpu_custom_call.1} parent=11 // pred_region
          %s188 = ssub.s32 16, 16
          %189 = vsyncadd [#allocation6], %s188
          %s191 = sshll.u32 %s0, 4
          %s192 = int_to_ptr.vmem [resolvable:$true] %s191
          %194 = dma.vmem_to_smem %s192, 16, [#allocation3], [#allocation6]
        $region16: #{tpu_custom_call.1} parent=11 // pred_fallthru
          _
        // Predicated region
        $region17: #{tpu_custom_call.1} parent=11 // pred_check
          %p195 = pneg %p65
        $region18: #{tpu_custom_call.1} parent=11 // pred_check_branch
          %197 = sbr.rel (%p195) target = $region20
        $region19: #{tpu_custom_call.1} parent=11 // pred_region
          _
        $region20: #{tpu_custom_call.1} parent=11 // pred_fallthru
          _
      $region12: #{tpu_custom_call.1} parent=5 // pred_fallthru
        _
      %p198 = scmp.lt.s32.totalorder %s23, 2
      // Predicated region
      $region21: #{tpu_custom_call.1} parent=5 // pred_check
        %p199 = pneg %p198
      $region22: #{tpu_custom_call.1} parent=5 // pred_check_branch
        %201 = sbr.rel (%p199) target = $region24
      $region23: #{tpu_custom_call.1} parent=5 // pred_region
        // Predicated region
        $region25: #{tpu_custom_call.1} parent=23 // pred_check
          %p202 = pneg %p85
        $region26: #{tpu_custom_call.1} parent=23 // pred_check_branch
          %204 = sbr.rel (%p202) target = $region28
        $region27: #{tpu_custom_call.1} parent=23 // pred_region
          %p205 = scmp.lt.s32.totalorder %s23, 1
          %s206 = scalar_select %p205, %s23, 1
          %s207 = scalar_lea.vmem %s2, %s206
        $region28: #{tpu_custom_call.1} parent=23 // pred_fallthru
          _
        // Predicated region
        $region29: #{tpu_custom_call.1} parent=23 // pred_check
          %p208 = pneg %p111
        $region30: #{tpu_custom_call.1} parent=23 // pred_check_branch
          %210 = sbr.rel (%p208) target = $region32
        $region31: #{tpu_custom_call.1} parent=23 // pred_region
          %s211 = sand.u32 %s101, 1
          %s212 = scalar_lea.sflag [#allocation4], %s211
          %s213 = sand.u32 %s101, 1
          %s214 = smul.addr %s213, 8
          %s215 = scalar_lea.vmem [#allocation7], %s214
          %s217 = ssub.s32 128, 128
          %218 = vsyncadd %s212, %s217
          %s219 = smul.addr %s23, 2
          %s220 = smul.addr %s219, 64
          %s221 = scalar_lea.hbm %s3, %s220
          %s222 = sshll.u32 %s215, 4
          %s223 = int_to_ptr.vmem [resolvable:$true] %s222
          %228 = dma.hbm_to_vmem [thread:$0]  %s221, 128, %s223, %s212, 64, 64, 4
        $region32: #{tpu_custom_call.1} parent=23 // pred_fallthru
          _
      $region24: #{tpu_custom_call.1} parent=5 // pred_fallthru
        _
      %p229 = scmp.le.s32.totalorder 1, %s23
      %p230 = scmp.lt.s32.totalorder %s23, 3
      %p231 = pnand %p229, %p230
      %p232 = pneg %p231
      // Predicated region
      $region33: #{tpu_custom_call.1} parent=5 // pred_check
        _
      $region34: #{tpu_custom_call.1} parent=5 // pred_check_branch
        %234 = sbr.rel (%p231) target = $region36
      $region35: #{tpu_custom_call.1} parent=5 // pred_region
        %s235 = ssub.s32 %s23, 1
        // Predicated region
        $region37: #{tpu_custom_call.1} parent=35 // pred_check
          %p236 = pneg %p44
        $region38: #{tpu_custom_call.1} parent=35 // pred_check_branch
          %238 = sbr.rel (%p236) target = $region40
        $region39: #{tpu_custom_call.1} parent=35 // pred_region
          %239 = dma.done [#allocation6], 16
        $region40: #{tpu_custom_call.1} parent=35 // pred_fallthru
          _
        %s240 = sand.u32 %s104, 1
        %s241 = scalar_lea.sflag [#allocation4], %s240
        %s242 = sand.u32 %s104, 1
        %s243 = smul.addr %s242, 8
        %s244 = scalar_lea.vmem [#allocation7], %s243
        // Predicated region
        $region41: #{tpu_custom_call.1} parent=35 // pred_check
          %p245 = pneg %p117
        $region42: #{tpu_custom_call.1} parent=35 // pred_check_branch
          %247 = sbr.rel (%p245) target = $region44
        $region43: #{tpu_custom_call.1} parent=35 // pred_region
          %248 = dma.done %s241, 128
        $region44: #{tpu_custom_call.1} parent=35 // pred_fallthru
          _
        %249 = sfence
        %p250 = pneg %p44
        %p251 = pneg %p41
        %p252 = pneg %p65
        %p253 = pneg %p62
        %p254 = scmp.lt.s32.totalorder %s28, 1
        %s255 = scalar_select %p254, %s28, 1
        %s256 = scalar_lea.vmem %s2, %s255
        %p257 = pneg %p91
        %p258 = pneg %p88
        %s259 = sand.u32 %s104, 1
        %s260 = scalar_lea.sflag [#allocation4], %s259
        %s261 = sand.u32 %s104, 1
        %s262 = smul.addr %s261, 8
        %s263 = scalar_lea.vmem [#allocation7], %s262
        %p264 = pneg %p117
        %p265 = pneg %p114
        %p266 = pneg %p143
        %p267 = pneg %p140
        %s268 = sand.u32 %s130, 1
        %s269 = scalar_lea.sflag [#allocation5], %s268
        %s270 = sand.u32 %s130, 1
        %s271 = smul.addr %s270, 16
        %s272 = scalar_lea.vmem [#allocation8], %s271
        %p273 = pneg %p169
        %p274 = pneg %p166
        %s275 = sand.u32 %s156, 1
        %s276 = scalar_lea.sflag [#allocation10], %s275
        %s277 = sand.u32 %s156, 1
        %s278 = scalar_lea.vmem [#allocation9], %s277
        %p279 = scmp.lt.s32.totalorder %s28, 1
        %s280 = scalar_select %p279, %s28, 1
        %s281 = scalar_lea.vmem %s2, %s280
        %v283 = vld [vmem:[%s281] sm:$0x1]
        %s284 = sld [smem:[#allocation3]]
        %v285 = vstv %s284
        %s286 = sld [smem:[#allocation3 + $0x1]]
        %v287 = vstv %s286
        %s288 = sld [smem:[#allocation3 + $0x2]]
        %v289 = vstv %s288
        %s290 = sld [smem:[#allocation3 + $0x3]]
        %v291 = vstv %s290
        %s292 = sld [smem:[#allocation3 + $0x4]]
        %v293 = vstv %s292
        %s294 = sld [smem:[#allocation2]]
        %v295 = vstv %s294
        %v296 = vmul.f32 %v283, %v293
        %v297 = vadd.f32 %v291, %v296
        %v298 = vmul.f32 %v283, %v297
        %v299 = vadd.f32 %v289, %v298
        %v300 = vmul.f32 %v283, %v299
        %v301 = vadd.f32 %v287, %v300
        %v302 = vmul.f32 %v283, %v301
        %v303 = vadd.f32 %v285, %v302
        %v304 = vmul.f32 %v283, %v303
        %v305 = vadd.f32 %v304, %v295
        %v306 = vxor.u32 %v305, 2147483648
        %v307 = vmul.f32 %v306, 1.442695
        %v308 = vpow.pop %v307
        %v309 = vadd.f32 %v308, 1.0
        %v310 = vrcp.pop %v309
        %v311 = vmul.f32 1.0, %v310
        %v312 = vmul.f32 %v311, %v293
        %v313 = vadd.f32 %v291, %v312
        %v314 = vmul.f32 %v311, %v313
        %v315 = vadd.f32 %v289, %v314
        %v316 = vmul.f32 %v311, %v315
        %v317 = vadd.f32 %v287, %v316
        %v318 = vmul.f32 %v311, %v317
        %v319 = vadd.f32 %v285, %v318
        %v320 = vmul.f32 %v311, %v319
        %v321 = vadd.f32 %v320, %v295
        %v322 = vxor.u32 %v321, 2147483648
        %v323 = vmul.f32 %v322, 1.442695
        %v324 = vpow.pop %v323
        %v325 = vadd.f32 %v324, 1.0
        %v326 = vrcp.pop %v325
        %v327 = vmul.f32 1.0, %v326
        %v328 = vmul.f32 %v327, %v293
        %v329 = vadd.f32 %v291, %v328
        %v330 = vmul.f32 %v327, %v329
        %v331 = vadd.f32 %v289, %v330
        %v332 = vmul.f32 %v327, %v331
        %v333 = vadd.f32 %v287, %v332
        %v334 = vmul.f32 %v327, %v333
        %v335 = vadd.f32 %v285, %v334
        %v336 = vmul.f32 %v327, %v335
        %v337 = vadd.f32 %v336, %v295
        %v338 = vxor.u32 %v337, 2147483648
        %v339 = vmul.f32 %v338, 1.442695
        %v340 = vpow.pop %v339
        %v341 = vadd.f32 %v340, 1.0
        %v342 = vrcp.pop %v341
        %v343 = vmul.f32 1.0, %v342
        %v344 = vmul.f32 %v343, %v293
        %v345 = vadd.f32 %v291, %v344
        %v346 = vmul.f32 %v343, %v345
        %v347 = vadd.f32 %v289, %v346
        %v348 = vmul.f32 %v343, %v347
        %v349 = vadd.f32 %v287, %v348
        %v350 = vmul.f32 %v343, %v349
        %v351 = vadd.f32 %v285, %v350
        %v352 = vmul.f32 %v343, %v351
        %v353 = vadd.f32 %v352, %v295
        %v354 = vxor.u32 %v353, 2147483648
        %v355 = vmul.f32 %v354, 1.442695
        %v356 = vpow.pop %v355
        %v357 = vadd.f32 %v356, 1.0
        %v358 = vrcp.pop %v357
        %v359 = vmul.f32 1.0, %v358
        %v360 = vmul.f32 %v359, %v293
        %v361 = vadd.f32 %v291, %v360
        %v362 = vmul.f32 %v359, %v361
        %v363 = vadd.f32 %v289, %v362
        %v364 = vmul.f32 %v359, %v363
        %v365 = vadd.f32 %v287, %v364
        %v366 = vmul.f32 %v359, %v365
        %v367 = vadd.f32 %v285, %v366
        %v368 = vmul.f32 %v359, %v367
        %v369 = vadd.f32 %v368, %v295
        %v370 = vxor.u32 %v369, 2147483648
        %v371 = vmul.f32 %v370, 1.442695
        %v372 = vpow.pop %v371
        %v373 = vadd.f32 %v372, 1.0
        %v374 = vrcp.pop %v373
        %v375 = vmul.f32 1.0, %v374
        %v376 = vmul.f32 %v375, %v293
        %v377 = vadd.f32 %v291, %v376
        %v378 = vmul.f32 %v375, %v377
        %v379 = vadd.f32 %v289, %v378
        %v380 = vmul.f32 %v375, %v379
        %v381 = vadd.f32 %v287, %v380
        %v382 = vmul.f32 %v375, %v381
        %v383 = vadd.f32 %v285, %v382
        %v384 = vmul.f32 %v375, %v383
        %v385 = vadd.f32 %v384, %v295
        %v386 = vxor.u32 %v385, 2147483648
        %v387 = vmul.f32 %v386, 1.442695
        %v388 = vpow.pop %v387
        %v389 = vadd.f32 %v388, 1.0
        %v390 = vrcp.pop %v389
        %v391 = vmul.f32 1.0, %v390
        %v392 = vmul.f32 %v391, %v293
        %v393 = vadd.f32 %v291, %v392
        %v394 = vmul.f32 %v391, %v393
        %v395 = vadd.f32 %v289, %v394
        %v396 = vmul.f32 %v391, %v395
        %v397 = vadd.f32 %v287, %v396
        %v398 = vmul.f32 %v391, %v397
        %v399 = vadd.f32 %v285, %v398
        %v400 = vmul.f32 %v391, %v399
        %v401 = vadd.f32 %v400, %v295
        %v402 = vxor.u32 %v401, 2147483648
        %v403 = vmul.f32 %v402, 1.442695
        %v404 = vpow.pop %v403
        %v405 = vadd.f32 %v404, 1.0
        %v406 = vrcp.pop %v405
        %v407 = vmul.f32 1.0, %v406
        %v408 = vmul.f32 %v407, %v293
        %v409 = vadd.f32 %v291, %v408
        %v410 = vmul.f32 %v407, %v409
        %v411 = vadd.f32 %v289, %v410
        %v412 = vmul.f32 %v407, %v411
        %v413 = vadd.f32 %v287, %v412
        %v414 = vmul.f32 %v407, %v413
        %v415 = vadd.f32 %v285, %v414
        %v416 = vmul.f32 %v407, %v415
        %v417 = vadd.f32 %v416, %v295
        %v418 = vxor.u32 %v417, 2147483648
        %v419 = vmul.f32 %v418, 1.442695
        %v420 = vpow.pop %v419
        %v421 = vadd.f32 %v420, 1.0
        %v422 = vrcp.pop %v421
        %v423 = vmul.f32 1.0, %v422
        %v424 = vmul.f32 %v423, %v293
        %v425 = vadd.f32 %v291, %v424
        %v426 = vmul.f32 %v423, %v425
        %v427 = vadd.f32 %v289, %v426
        %v428 = vmul.f32 %v423, %v427
        %v429 = vadd.f32 %v287, %v428
        %v430 = vmul.f32 %v423, %v429
        %v431 = vadd.f32 %v285, %v430
        %v432 = vmul.f32 %v423, %v431
        %v433 = vadd.f32 %v432, %v295
        %v434 = vxor.u32 %v433, 2147483648
        %v435 = vmul.f32 %v434, 1.442695
        %v436 = vpow.pop %v435
        %v437 = vadd.f32 %v436, 1.0
        %v438 = vrcp.pop %v437
        %v439 = vmul.f32 1.0, %v438
        %v440 = vmul.f32 %v439, %v293
        %v441 = vadd.f32 %v291, %v440
        %v442 = vmul.f32 %v439, %v441
        %v443 = vadd.f32 %v289, %v442
        %v444 = vmul.f32 %v439, %v443
        %v445 = vadd.f32 %v287, %v444
        %v446 = vmul.f32 %v439, %v445
        %v447 = vadd.f32 %v285, %v446
        %v448 = vmul.f32 %v439, %v447
        %v449 = vadd.f32 %v448, %v295
        %v450 = vxor.u32 %v449, 2147483648
        %v451 = vmul.f32 %v450, 1.442695
        %v452 = vpow.pop %v451
        %v453 = vadd.f32 %v452, 1.0
        %v454 = vrcp.pop %v453
        %v455 = vmul.f32 1.0, %v454
        %vm456 = vcmask 122880
        %457 = vst.msk [vmem:[%s278] sm:$0x1] %vm456, %v455
        %v458 = vld [vmem:[%s244] sm:$0xf]
        %v459 = vld [vmem:[%s244 + $0x4] sm:$0xf]
        %v460 = vpack.c.bf16 %v455, %v455
        %v462 = vpack.i.b16 %v460, %v460
        %v464 = vlaneseq
        %v465 = vshrl.u32 %v464, 7
        %v466 = vsub.s32 0, %v465
        %v467 = vrot.slane %v462, %v466
        %v469 = vunpack.c.l.b16 %v467
        %v470 = vpack.c.b16 %v469, %v469
        %v472 = vmul.bf16 %v458, %v470
        %v473 = vmul.bf16 %v459, %v470
        %v476 = vunpack.c.l.b16 %v472
        %v477 = vunpack.c.l.b16 %v473
        %v478 = vpack.c.b16 %v477, %v476
        %v481 = vunpack.c.l.b16 %v458
        %v482 = vunpack.c.l.b16 %v459
        %v483 = vpack.c.b16 %v482, %v481
        %vm484 = vcmask 130048
        %v486 = vsel %vm484, %v478, 0
        %v489 = vsel %vm484, %v483, 0
        %491 = vmatprep.subr.bf16.mxu0 0
        %492 = vmatpush1.bf16.xpose.msra.mxu0 %v489
        %493 = vmatprep.subr.bf16.mxu0 0
        %494 = vmatpush1.bf16.xpose.msra.mxu0 0
        %495 = vmatprep.subr.bf16.mxu0 0
        %496 = vmatpush1.bf16.xpose.msra.mxu0 0
        %497 = vmatprep.subr.bf16.mxu0 0
        %498 = vmatpush1.bf16.xpose.msra.mxu0 0
        %499 = vmatprep.subr.bf16.mxu0 0
        %500 = vmatpush1.bf16.xpose.msra.mxu0 0
        %501 = vmatprep.subr.bf16.mxu0 0
        %502 = vmatpush1.bf16.xpose.msra.mxu0 0
        %503 = vmatprep.subr.bf16.mxu0 0
        %504 = vmatpush1.bf16.xpose.msra.mxu0 0
        %505 = vmatprep.subr.bf16.mxu0 0
        %506 = vmatpush1.bf16.xpose.msra.mxu0 0
        %507 = vmatprep.subr.bf16.mxu0 0
        %508 = vmatpush1.bf16.xpose.msra.mxu0 0
        %509 = vmatprep.subr.bf16.mxu0 0
        %510 = vmatpush1.bf16.xpose.msra.mxu0 0
        %511 = vmatprep.subr.bf16.mxu0 0
        %512 = vmatpush1.bf16.xpose.msra.mxu0 0
        %513 = vmatprep.subr.bf16.mxu0 0
        %514 = vmatpush1.bf16.xpose.msra.mxu0 0
        %515 = vmatprep.subr.bf16.mxu0 0
        %516 = vmatpush1.bf16.xpose.msra.mxu0 0
        %517 = vmatprep.subr.bf16.mxu0 0
        %518 = vmatpush1.bf16.xpose.msra.mxu0 0
        %519 = vmatprep.subr.bf16.mxu0 0
        %520 = vmatpush1.bf16.xpose.msra.mxu0 0
        %521 = vmatprep.subr.bf16.mxu0 0
        %522 = vmatpush1.bf16.xpose.msra.mxu0 0
        %523 = vmatprep.mubr.bf16.mxu0 0
        %524 = vmatmul.mubr.bf16.gmra.mrb[0].mxu0 %v486
        %v525 = vpop.f32.mrb[0].mxu0
        %v526 = vadd.f32 0.0, %v525
        %v527 = vpop.f32.mrb[0].mxu0
        %v528 = vpop.f32.mrb[0].mxu0
        %v529 = vadd.f32 0.0, %v528
        %v530 = vpop.f32.mrb[0].mxu0
        %531 = vdwg.mxu0
        %532 = vst.msk [vmem:[%s272] sm:$0xff] %vm484, %v526
        %533 = vst.msk [vmem:[%s272 + $0x8] sm:$0xff] %vm484, %v529
        %s534 = sand.u32 %s130, 1
        %s535 = scalar_lea.sflag [#allocation5], %s534
        %s536 = sand.u32 %s130, 1
        %s537 = smul.addr %s536, 16
        %s538 = scalar_lea.vmem [#allocation8], %s537
        %s539 = sand.u32 %s156, 1
        %s540 = scalar_lea.sflag [#allocation10], %s539
        %s541 = sand.u32 %s156, 1
        %s542 = scalar_lea.vmem [#allocation9], %s541
        // Predicated region
        $region45: #{tpu_custom_call.1} parent=35 // pred_check
          %p543 = pneg %p140
        $region46: #{tpu_custom_call.1} parent=35 // pred_check_branch
          %545 = sbr.rel (%p543) target = $region48
        $region47: #{tpu_custom_call.1} parent=35 // pred_region
          %s547 = ssub.s32 256, 256
          %548 = vsyncadd %s535, %s547
          %s549 = smul.addr %s28, 2
          %s550 = smul.addr %s549, 128
          %s551 = scalar_lea.hbm %s4, %s550
          %s552 = sshll.u32 %s538, 4
          %s553 = int_to_ptr.vmem [resolvable:$true] %s552
          %558 = dma.vmem_to_hbm [thread:$0]  %s553, 256, %s551, %s535, 128, 128, 8
        $region48: #{tpu_custom_call.1} parent=35 // pred_fallthru
          _
        // Predicated region
        $region49: #{tpu_custom_call.1} parent=35 // pred_check
          %p559 = pneg %p166
        $region50: #{tpu_custom_call.1} parent=35 // pred_check_branch
          %561 = sbr.rel (%p559) target = $region52
        $region51: #{tpu_custom_call.1} parent=35 // pred_region
          %s563 = ssub.s32 16, 16
          %564 = vsyncadd %s540, %s563
          %s565 = smul.addr %s28, 16
          %s566 = scalar_lea.hbm %s5, %s565
          %s568 = sshll.u32 %s542, 4
          %s569 = int_to_ptr.vmem [resolvable:$true] %s568
          %571 = dma.vmem_to_hbm [thread:$0]  %s569, 16, %s566, %s540
        $region52: #{tpu_custom_call.1} parent=35 // pred_fallthru
          _
      $region36: #{tpu_custom_call.1} parent=5 // pred_fallthru
        _
      %p572 = scmp.le.s32.totalorder 2, %s23
      // Predicated region
      $region53: #{tpu_custom_call.1} parent=5 // pred_check
        %p573 = pneg %p572
      $region54: #{tpu_custom_call.1} parent=5 // pred_check_branch
        %575 = sbr.rel (%p573) target = $region56
      $region55: #{tpu_custom_call.1} parent=5 // pred_region
        %s576 = ssub.s32 %s23, 2
        // Predicated region
        $region57: #{tpu_custom_call.1} parent=55 // pred_check
          %p577 = pneg %p146
        $region58: #{tpu_custom_call.1} parent=55 // pred_check_branch
          %579 = sbr.rel (%p577) target = $region60
        $region59: #{tpu_custom_call.1} parent=55 // pred_region
          %s580 = sand.u32 %s131, 1
          %s581 = scalar_lea.sflag [#allocation5], %s580
          %s582 = sand.u32 %s131, 1
          %s583 = smul.addr %s582, 16
          %s584 = scalar_lea.vmem [#allocation8], %s583
          %585 = dma.done %s581, 256
        $region60: #{tpu_custom_call.1} parent=55 // pred_fallthru
          _
        // Predicated region
        $region61: #{tpu_custom_call.1} parent=55 // pred_check
          %p586 = pneg %p172
        $region62: #{tpu_custom_call.1} parent=55 // pred_check_branch
          %588 = sbr.rel (%p586) target = $region64
        $region63: #{tpu_custom_call.1} parent=55 // pred_region
          %s589 = sand.u32 %s157, 1
          %s590 = scalar_lea.sflag [#allocation10], %s589
          %s591 = sand.u32 %s157, 1
          %s592 = scalar_lea.vmem [#allocation9], %s591
          %593 = dma.done %s590, 16
        $region64: #{tpu_custom_call.1} parent=55 // pred_fallthru
          _
      $region56: #{tpu_custom_call.1} parent=5 // pred_fallthru
        _
    $region6: #{tpu_custom_call.1} parent=1 // loop_footer
      %s27 = sadd.s32 1, %s23
    $region7: #{tpu_custom_call.1} parent=1 // loop_footer_branch
      %22 = sbr.rel target = $region3
    $region8: #{tpu_custom_call.1} parent=1 // loop_exit
      _
    %594 = vsyncpa [#allocation4], 1
    %s595 = scalar_lea.sflag [#allocation4], 1
    %596 = vsyncpa %s595, 1
    %597 = vsyncpa [#allocation5], 1
    %s598 = scalar_lea.sflag [#allocation5], 1
    %599 = vsyncpa %s598, 1
    %600 = vsyncpa [#allocation10], 1
    %s601 = scalar_lea.sflag [#allocation10], 1
    %602 = vsyncpa %s601, 1
    %603 = vsyncpa [#allocation6], 1
    %s604 = scalar_lea.sflag [#allocation6], 1
    %605 = vsyncpa %s604, 1

</llo_original>
